<compile_context>
chip_gen: v7x
topology: tpu7x:2x2x1
jax: 0.10.0
libtpu: 0.0.40
codegen_flags: <defaults>
</compile_context>

<pallas_src>
import jax
import jax.numpy as jnp
from jax.experimental import pallas as pl
from jax.experimental.pallas import tpu as pltpu


def _broadcast_kernel(f_ref, o_ref):
    # f_ref: (1, BF) slab of the flattened feats parameter (VMEM).
    # o_ref: (BT, BF) output block covering BT batch elements.
    # Sublane-broadcast the single feats row across the whole output block.
    o_ref[...] = jnp.broadcast_to(f_ref[...], o_ref.shape)


def _choose_tiles(n, flat, itemsize, target_block_bytes=4 << 20):
    """Pick (BT, BF) so one OUTPUT block is roughly target_block_bytes.

    Lane dim BF is a multiple of 128 (or the full extent); batch dim BT is a
    multiple of 8 (or the full extent), satisfying the (8, 128) constraint.
    BF is sized against target_block_bytes // min(n, 8) so that once the
    batch axis is tiled at >= 8 sublanes the whole block -- not a single
    row -- hits the target.  ~4 MiB blocks double-buffer comfortably on
    v5e/v6e (128 MiB VMEM) and v7x (64 MiB VMEM).
    """
    sub = min(n, 8)  # minimum sublane count of a batch-tiled block
    if flat * itemsize * sub <= target_block_bytes:
        bf = flat                                      # full lane extent
    else:
        bf = (target_block_bytes // (sub * itemsize)) // 128 * 128
        bf = max(128, min(bf, flat))
    block_row_bytes = bf * itemsize
    max_rows = max(1, target_block_bytes // block_row_bytes)
    if n <= max_rows:
        bt = n                                         # full extent: always legal
    else:
        bt = min(n, max(8, (max_rows // 8) * 8))       # multiple of 8 sublanes
    # v7x megacore: if both axes would end up with a single block, split the
    # batch axis so the two TensorCores both have output blocks to write.
    if bf == flat and bt == n and n >= 16:
        bt = max(8, ((n // 2) // 8) * 8)
    return bt, bf


def encoder_dummy_forward(x, feats, *, fast_path_bytes=2 << 20, force_pallas=False):
    """Reproduces EncoderDummy.forward: return [feats.expand(n, -1, -1, -1)].

    x:     (n, ...) -- only the batch size n is used.
    feats: (num_views, feat_dim, H, W) with num_views == 1.
    """
    n = x.shape[0]
    num_views, feat_dim, H, W = feats.shape
    assert num_views == 1, "expand(n, -1, -1, -1) requires num_views == 1"

    flat = feat_dim * H * W
    itemsize = jnp.dtype(feats.dtype).itemsize
    total_bytes = n * flat * itemsize

    # Small-output fast path: kernel-launch + per-grid-step overhead dwarfs a
    # tiny copy, and the XLA broadcast can fuse into the consumer (often
    # avoiding HBM materialization entirely).
    if not force_pallas and total_bytes <= fast_path_bytes:
        return [jnp.broadcast_to(feats, (n, feat_dim, H, W))]

    bt, bf = _choose_tiles(n, flat, itemsize)

    # Lane-dense layout plumbing (free reshape, no data movement).
    feats_flat = feats.reshape(1, flat)

    # Grid order: lane slabs OUTER, batch blocks INNER.  The feats block index
    # depends only on the outer axis, so the parameter slab is DMA'd once per
    # lane slab and reused across every batch block (no redundant HBM reads).
    grid = (pl.cdiv(flat, bf), pl.cdiv(n, bt))

    # Explicit VMEM budget: 2x double-buffered output block + 2x input slab
    # + headroom.  Keeps double-buffering alive on v7x's 64 MiB VMEM.
    block_out_bytes = bt * bf * itemsize
    block_in_bytes = bf * itemsize
    vmem_limit = 2 * (block_out_bytes + block_in_bytes) + (4 << 20)
    vmem_limit = int(min(max(vmem_limit, 16 << 20), 48 << 20))

    out_flat = pl.pallas_call(
        _broadcast_kernel,
        out_shape=jax.ShapeDtypeStruct((n, flat), feats.dtype),
        grid_spec=pltpu.PrefetchScalarGridSpec(
            num_scalar_prefetch=0,
            grid=grid,
            in_specs=[
                # Constant along the inner (batch) axis -> fetched once per
                # lane slab, reused for every batch block.
                pl.BlockSpec((1, bf), lambda j, i: (0, j)),
            ],
            out_specs=pl.BlockSpec((bt, bf), lambda j, i: (i, j)),
        ),
        compiler_params=pltpu.CompilerParams(
            # Both axes are independent copies -> parallel (megacore on v7x).
            dimension_semantics=("parallel", "parallel"),
            vmem_limit_bytes=vmem_limit,
        ),
    )(feats_flat)

    return [out_flat.reshape(n, feat_dim, H, W)]


class EncoderDummy:
    """JAX/Pallas port of models/bts/trainer_overfit.py::EncoderDummy."""

    def __init__(self, size, feat_dim, num_views=1, *, key=None):
        if key is None:
            key = jax.random.PRNGKey(0)
        # torch.randn(num_views, feat_dim, *size) -> deterministic normal init.
        self.feats = jax.random.normal(
            key, (num_views, feat_dim, *size), dtype=jnp.float32
        )
        self.latent_size = feat_dim

    def __call__(self, x, **kwargs):
        return encoder_dummy_forward(x, self.feats, **kwargs)


if __name__ == "__main__":
    key = jax.random.PRNGKey(0)
    k_feat, k_x = jax.random.split(key)

    # Small shapes consistent with the module: batch=2, 3-channel input image,
    # feat_dim=16, spatial size (16, 16), num_views=1.
    size = (16, 16)
    feat_dim = 16
    batch = 2

    enc = EncoderDummy(size, feat_dim, num_views=1, key=k_feat)
    x = jax.random.normal(k_x, (batch, 3, 16, 16), dtype=jnp.float32)
    ref = jnp.broadcast_to(enc.feats, (batch, feat_dim, *size))

    # 1) Default path: small output -> XLA broadcast fast path.
    out_fast = jax.block_until_ready(enc(x)[0])
    assert out_fast.shape == (batch, feat_dim, *size), out_fast.shape
    assert out_fast.dtype == enc.feats.dtype
    assert jnp.allclose(out_fast, ref), "fast-path broadcast mismatch"

    # 2) Forced Pallas path: exercise the actual kernel on the same shapes.
    out_pallas = jax.block_until_ready(enc(x, force_pallas=True)[0])
    assert out_pallas.shape == (batch, feat_dim, *size), out_pallas.shape
    assert out_pallas.dtype == enc.feats.dtype
    assert jnp.allclose(out_pallas, ref), "Pallas broadcast copy mismatch"

    print("KERNEL_OK")
</pallas_src>

<mosaic_0001>
module attributes {stable_mosaic.version = 11 : i64} {
  func.func @_broadcast_kernel(%arg0: i32, %arg1: i32, %arg2: memref<1x4096xf32, #tpu.memory_space<vmem>>, %arg3: memref<2x4096xf32, #tpu.memory_space<vmem>>) attributes {dimension_semantics = [#tpu.dimension_semantics<parallel>, #tpu.dimension_semantics<parallel>], iteration_bounds = array<i64: 1, 1>, scalar_prefetch = 0 : i64, scratch_operands = 0 : i64, tpu.core_type = #tpu.core_type<tc>, window_params = [{transform_indices = @transform_0, window_bounds = array<i64: 1, 4096>}, {transform_indices = @transform_1, window_bounds = array<i64: 2, 4096>}]} {
    %c0 = arith.constant 0 : index
    %c0_0 = arith.constant 0 : index
    %0 = vector.load %arg2[%c0, %c0_0] : memref<1x4096xf32, #tpu.memory_space<vmem>>, vector<1x4096xf32>
    %1 = vector.shape_cast %0 : vector<1x4096xf32> to vector<1x4096xf32>
    %2 = vector.broadcast %1 : vector<1x4096xf32> to vector<2x4096xf32>
    %c0_1 = arith.constant 0 : index
    %c0_2 = arith.constant 0 : index
    %3 = vector.load %arg3[%c0_1, %c0_2] : memref<2x4096xf32, #tpu.memory_space<vmem>>, vector<2x4096xf32>
    tpu.vector_store %arg3[%c0_1, %c0_2], %2 {strides = array<i32>} : memref<2x4096xf32, #tpu.memory_space<vmem>>, vector<2x4096xf32>,
    return
  }
  func.func @transform_0(%arg0: i32, %arg1: i32) -> (i32, i32) {
    %c0_i32 = arith.constant 0 : i32
    %c0_i32_0 = arith.constant 0 : i32
    return %c0_i32, %arg0 : i32, i32
  }
  func.func @transform_1(%arg0: i32, %arg1: i32) -> (i32, i32) {
    %c0_i32 = arith.constant 0 : i32
    return %arg1, %arg0 : i32, i32
  }
}

</mosaic_0001>

<llo_original>
// kernel: tpu_custom_call.1
$region0: #{tpu_custom_call.1}
  #allocation0 [shape = 'u32[]', space=smem, size = 0x4, offset = 0x4, fixed_abs, tag = 'smem constant byte address 0x4 - core index']
  #allocation1 [shape = 'u32[144,128]{1,0:T(1,128)}', space=vmem, size = 0x12000, scoped, tag = 'internal scratch']
  %s0 = inlined_call_operand.hbm [shape: f32[1,4096], index: 0, kind: input, shape index: {}]
  %s1 = inlined_call_operand.hbm [shape: f32[2,4096], index: 1, kind: output, shape index: {}]
  %s2 = sld [smem:[#allocation0]]
  $region18: #{tpu_custom_call.1} parent=0
    _
  %s4 = ssub.s32 1, %s2
  %s5 = scalar_select 0, %s4, %s2
  $region1: #{tpu_custom_call.1} parent=0
    #allocation2 [shape = 'u8[16384]{0}', space=vmem, size = 0x4000, scoped, tag = 'input window, operand 0, single buffered']
    #allocation3 [shape = 's32[1]{0}', space=sflag, size = 0x4, scoped, tag = 'scoped memory for tpu_custom_call.1']
    #allocation4 [shape = 's32[1]{0}', space=sflag, size = 0x4, scoped, tag = 'scoped memory for tpu_custom_call.1']
    #allocation5 [shape = 'u8[32768]{0}', space=vmem, size = 0x8000, scoped, tag = 'output window, operand 0, single buffered']
    %6 = vsyncpa [#allocation3], 0
    %7 = vsyncpa [#allocation4], 0
    // Predicated region
    $region2: #{tpu_custom_call.1} parent=1 // pred_check
      _
    $region3: #{tpu_custom_call.1} parent=1 // pred_check_branch
      %9 = sbr.rel (0) target = $region5
    $region4: #{tpu_custom_call.1} parent=1 // pred_region
      %s11 = ssub.s32 512, 512
      %12 = vsyncadd [#allocation3], %s11
      %s14 = sshll.u32 [#allocation2], 4
      %s15 = int_to_ptr.vmem [resolvable:$true] %s14
      %17 = dma.hbm_to_vmem [thread:$0]  %s0, 512, %s15, [#allocation3]
    $region5: #{tpu_custom_call.1} parent=1 // pred_fallthru
      _
    // Predicated region
    $region6: #{tpu_custom_call.1} parent=1 // pred_check
      _
    $region7: #{tpu_custom_call.1} parent=1 // pred_check_branch
      %19 = sbr.rel (0) target = $region9
    $region8: #{tpu_custom_call.1} parent=1 // pred_region
      %20 = dma.done [#allocation3], 512
    $region9: #{tpu_custom_call.1} parent=1 // pred_fallthru
      _
    %v21 = vld [vmem:[#allocation2] sm:$0xff]
    %v22 = vld [vmem:[#allocation2 + $0x8] sm:$0xff]
    %v23 = vld [vmem:[#allocation2 + $0x10] sm:$0xff]
    %v24 = vld [vmem:[#allocation2 + $0x18] sm:$0xff]
    %v29 = vlaneseq
    %v30 = vshrl.u32 %v29, 7
    %v31 = vsub.s32 0, %v30
    %v32 = vrot.slane %v21, %v31
    %v33 = vlaneseq
    %v34 = vshrl.u32 %v33, 7
    %v35 = vsub.s32 1, %v34
    %v36 = vrot.slane %v21, %v35
    %v37 = vlaneseq
    %v38 = vshrl.u32 %v37, 7
    %v39 = vsub.s32 2, %v38
    %v40 = vrot.slane %v21, %v39
    %v41 = vlaneseq
    %v42 = vshrl.u32 %v41, 7
    %v43 = vsub.s32 3, %v42
    %v44 = vrot.slane %v21, %v43
    %v45 = vlaneseq
    %v46 = vshrl.u32 %v45, 7
    %v47 = vsub.s32 4, %v46
    %v48 = vrot.slane %v21, %v47
    %v49 = vlaneseq
    %v50 = vshrl.u32 %v49, 7
    %v51 = vsub.s32 5, %v50
    %v52 = vrot.slane %v21, %v51
    %v53 = vlaneseq
    %v54 = vshrl.u32 %v53, 7
    %v55 = vsub.s32 6, %v54
    %v56 = vrot.slane %v21, %v55
    %v57 = vlaneseq
    %v58 = vshrl.u32 %v57, 7
    %v59 = vsub.s32 7, %v58
    %v60 = vrot.slane %v21, %v59
    %v61 = vlaneseq
    %v62 = vshrl.u32 %v61, 7
    %v63 = vsub.s32 0, %v62
    %v64 = vrot.slane %v22, %v63
    %v65 = vlaneseq
    %v66 = vshrl.u32 %v65, 7
    %v67 = vsub.s32 1, %v66
    %v68 = vrot.slane %v22, %v67
    %v69 = vlaneseq
    %v70 = vshrl.u32 %v69, 7
    %v71 = vsub.s32 2, %v70
    %v72 = vrot.slane %v22, %v71
    %v73 = vlaneseq
    %v74 = vshrl.u32 %v73, 7
    %v75 = vsub.s32 3, %v74
    %v76 = vrot.slane %v22, %v75
    %v77 = vlaneseq
    %v78 = vshrl.u32 %v77, 7
    %v79 = vsub.s32 4, %v78
    %v80 = vrot.slane %v22, %v79
    %v81 = vlaneseq
    %v82 = vshrl.u32 %v81, 7
    %v83 = vsub.s32 5, %v82
    %v84 = vrot.slane %v22, %v83
    %v85 = vlaneseq
    %v86 = vshrl.u32 %v85, 7
    %v87 = vsub.s32 6, %v86
    %v88 = vrot.slane %v22, %v87
    %v89 = vlaneseq
    %v90 = vshrl.u32 %v89, 7
    %v91 = vsub.s32 7, %v90
    %v92 = vrot.slane %v22, %v91
    %v93 = vlaneseq
    %v94 = vshrl.u32 %v93, 7
    %v95 = vsub.s32 0, %v94
    %v96 = vrot.slane %v23, %v95
    %v97 = vlaneseq
    %v98 = vshrl.u32 %v97, 7
    %v99 = vsub.s32 1, %v98
    %v100 = vrot.slane %v23, %v99
    %v101 = vlaneseq
    %v102 = vshrl.u32 %v101, 7
    %v103 = vsub.s32 2, %v102
    %v104 = vrot.slane %v23, %v103
    %v105 = vlaneseq
    %v106 = vshrl.u32 %v105, 7
    %v107 = vsub.s32 3, %v106
    %v108 = vrot.slane %v23, %v107
    %v109 = vlaneseq
    %v110 = vshrl.u32 %v109, 7
    %v111 = vsub.s32 4, %v110
    %v112 = vrot.slane %v23, %v111
    %v113 = vlaneseq
    %v114 = vshrl.u32 %v113, 7
    %v115 = vsub.s32 5, %v114
    %v116 = vrot.slane %v23, %v115
    %v117 = vlaneseq
    %v118 = vshrl.u32 %v117, 7
    %v119 = vsub.s32 6, %v118
    %v120 = vrot.slane %v23, %v119
    %v121 = vlaneseq
    %v122 = vshrl.u32 %v121, 7
    %v123 = vsub.s32 7, %v122
    %v124 = vrot.slane %v23, %v123
    %v125 = vlaneseq
    %v126 = vshrl.u32 %v125, 7
    %v127 = vsub.s32 0, %v126
    %v128 = vrot.slane %v24, %v127
    %v129 = vlaneseq
    %v130 = vshrl.u32 %v129, 7
    %v131 = vsub.s32 1, %v130
    %v132 = vrot.slane %v24, %v131
    %v133 = vlaneseq
    %v134 = vshrl.u32 %v133, 7
    %v135 = vsub.s32 2, %v134
    %v136 = vrot.slane %v24, %v135
    %v137 = vlaneseq
    %v138 = vshrl.u32 %v137, 7
    %v139 = vsub.s32 3, %v138
    %v140 = vrot.slane %v24, %v139
    %v141 = vlaneseq
    %v142 = vshrl.u32 %v141, 7
    %v143 = vsub.s32 4, %v142
    %v144 = vrot.slane %v24, %v143
    %v145 = vlaneseq
    %v146 = vshrl.u32 %v145, 7
    %v147 = vsub.s32 5, %v146
    %v148 = vrot.slane %v24, %v147
    %v149 = vlaneseq
    %v150 = vshrl.u32 %v149, 7
    %v151 = vsub.s32 6, %v150
    %v152 = vrot.slane %v24, %v151
    %v153 = vlaneseq
    %v154 = vshrl.u32 %v153, 7
    %v155 = vsub.s32 7, %v154
    %v156 = vrot.slane %v24, %v155
    %v157 = vcombine.low %v32, %v36
    %v158 = vcombine.low %v40, %v44
    %v160 = vunpack.c.l.s4 1983009808
    %v161 = vunpack.c.0.s8 %v160
    %v162 = vlaneseq
    %v163 = vshrl.u32 %v162, 7
    %v164 = vsub.s32 %v161, %v163
    %v165 = vrot.slane %v157, %v164
    %v167 = vunpack.c.l.s4 1983009808
    %v168 = vunpack.c.0.s8 %v167
    %v169 = vlaneseq
    %v170 = vshrl.u32 %v169, 7
    %v171 = vsub.s32 %v168, %v170
    %v172 = vrot.slane %v158, %v171
    %v173 = vcombine.low %v165, %v172
    %v174 = vcombine.low %v48, %v52
    %v175 = vcombine.low %v56, %v60
    %v177 = vunpack.c.l.s4 1983009808
    %v178 = vunpack.c.0.s8 %v177
    %v179 = vlaneseq
    %v180 = vshrl.u32 %v179, 7
    %v181 = vsub.s32 %v178, %v180
    %v182 = vrot.slane %v174, %v181
    %v184 = vunpack.c.l.s4 1983009808
    %v185 = vunpack.c.0.s8 %v184
    %v186 = vlaneseq
    %v187 = vshrl.u32 %v186, 7
    %v188 = vsub.s32 %v185, %v187
    %v189 = vrot.slane %v175, %v188
    %v190 = vcombine.low %v182, %v189
    %v191 = vcombine.low %v64, %v68
    %v192 = vcombine.low %v72, %v76
    %v194 = vunpack.c.l.s4 1983009808
    %v195 = vunpack.c.0.s8 %v194
    %v196 = vlaneseq
    %v197 = vshrl.u32 %v196, 7
    %v198 = vsub.s32 %v195, %v197
    %v199 = vrot.slane %v191, %v198
    %v201 = vunpack.c.l.s4 1983009808
    %v202 = vunpack.c.0.s8 %v201
    %v203 = vlaneseq
    %v204 = vshrl.u32 %v203, 7
    %v205 = vsub.s32 %v202, %v204
    %v206 = vrot.slane %v192, %v205
    %v207 = vcombine.low %v199, %v206
    %v208 = vcombine.low %v80, %v84
    %v209 = vcombine.low %v88, %v92
    %v211 = vunpack.c.l.s4 1983009808
    %v212 = vunpack.c.0.s8 %v211
    %v213 = vlaneseq
    %v214 = vshrl.u32 %v213, 7
    %v215 = vsub.s32 %v212, %v214
    %v216 = vrot.slane %v208, %v215
    %v218 = vunpack.c.l.s4 1983009808
    %v219 = vunpack.c.0.s8 %v218
    %v220 = vlaneseq
    %v221 = vshrl.u32 %v220, 7
    %v222 = vsub.s32 %v219, %v221
    %v223 = vrot.slane %v209, %v222
    %v224 = vcombine.low %v216, %v223
    %v225 = vcombine.low %v96, %v100
    %v226 = vcombine.low %v104, %v108
    %v228 = vunpack.c.l.s4 1983009808
    %v229 = vunpack.c.0.s8 %v228
    %v230 = vlaneseq
    %v231 = vshrl.u32 %v230, 7
    %v232 = vsub.s32 %v229, %v231
    %v233 = vrot.slane %v225, %v232
    %v235 = vunpack.c.l.s4 1983009808
    %v236 = vunpack.c.0.s8 %v235
    %v237 = vlaneseq
    %v238 = vshrl.u32 %v237, 7
    %v239 = vsub.s32 %v236, %v238
    %v240 = vrot.slane %v226, %v239
    %v241 = vcombine.low %v233, %v240
    %v242 = vcombine.low %v112, %v116
    %v243 = vcombine.low %v120, %v124
    %v245 = vunpack.c.l.s4 1983009808
    %v246 = vunpack.c.0.s8 %v245
    %v247 = vlaneseq
    %v248 = vshrl.u32 %v247, 7
    %v249 = vsub.s32 %v246, %v248
    %v250 = vrot.slane %v242, %v249
    %v252 = vunpack.c.l.s4 1983009808
    %v253 = vunpack.c.0.s8 %v252
    %v254 = vlaneseq
    %v255 = vshrl.u32 %v254, 7
    %v256 = vsub.s32 %v253, %v255
    %v257 = vrot.slane %v243, %v256
    %v258 = vcombine.low %v250, %v257
    %v259 = vcombine.low %v128, %v132
    %v260 = vcombine.low %v136, %v140
    %v262 = vunpack.c.l.s4 1983009808
    %v263 = vunpack.c.0.s8 %v262
    %v264 = vlaneseq
    %v265 = vshrl.u32 %v264, 7
    %v266 = vsub.s32 %v263, %v265
    %v267 = vrot.slane %v259, %v266
    %v269 = vunpack.c.l.s4 1983009808
    %v270 = vunpack.c.0.s8 %v269
    %v271 = vlaneseq
    %v272 = vshrl.u32 %v271, 7
    %v273 = vsub.s32 %v270, %v272
    %v274 = vrot.slane %v260, %v273
    %v275 = vcombine.low %v267, %v274
    %v276 = vcombine.low %v144, %v148
    %v277 = vcombine.low %v152, %v156
    %v279 = vunpack.c.l.s4 1983009808
    %v280 = vunpack.c.0.s8 %v279
    %v281 = vlaneseq
    %v282 = vshrl.u32 %v281, 7
    %v283 = vsub.s32 %v280, %v282
    %v284 = vrot.slane %v276, %v283
    %v286 = vunpack.c.l.s4 1983009808
    %v287 = vunpack.c.0.s8 %v286
    %v288 = vlaneseq
    %v289 = vshrl.u32 %v288, 7
    %v290 = vsub.s32 %v287, %v289
    %v291 = vrot.slane %v277, %v290
    %v292 = vcombine.low %v284, %v291
    %301 = vst [vmem:[#allocation5] sm:$0xff] %v173
    %302 = vst [vmem:[#allocation5 + $0x8] sm:$0xff] %v190
    %303 = vst [vmem:[#allocation5 + $0x10] sm:$0xff] %v207
    %304 = vst [vmem:[#allocation5 + $0x18] sm:$0xff] %v224
    %305 = vst [vmem:[#allocation5 + $0x20] sm:$0xff] %v241
    %306 = vst [vmem:[#allocation5 + $0x28] sm:$0xff] %v258
    %307 = vst [vmem:[#allocation5 + $0x30] sm:$0xff] %v275
    %308 = vst [vmem:[#allocation5 + $0x38] sm:$0xff] %v292
    // Predicated region
    $region10: #{tpu_custom_call.1} parent=1 // pred_check
      _
    $region11: #{tpu_custom_call.1} parent=1 // pred_check_branch
      %310 = sbr.rel (0) target = $region13
    $region12: #{tpu_custom_call.1} parent=1 // pred_region
      %s312 = ssub.s32 1024, 1024
      %313 = vsyncadd [#allocation4], %s312
      %s315 = sshll.u32 [#allocation5], 4
      %s316 = int_to_ptr.vmem [resolvable:$true] %s315
      %318 = dma.vmem_to_hbm [thread:$0]  %s316, 1024, %s1, [#allocation4]
    $region13: #{tpu_custom_call.1} parent=1 // pred_fallthru
      _
    // Predicated region
    $region14: #{tpu_custom_call.1} parent=1 // pred_check
      _
    $region15: #{tpu_custom_call.1} parent=1 // pred_check_branch
      %320 = sbr.rel (0) target = $region17
    $region16: #{tpu_custom_call.1} parent=1 // pred_region
      %321 = dma.done [#allocation4], 1024
    $region17: #{tpu_custom_call.1} parent=1 // pred_fallthru
      _
    %322 = vsyncpa [#allocation3], 1
    %323 = vsyncpa [#allocation4], 1

</llo_original>
